<compile_context>
chip_gen: v6e
topology: v6e:2x2x1
jax: 0.10.0
libtpu: 0.0.40
codegen_flags: <defaults>
</compile_context>

<pallas_src>
import functools

import jax
import jax.numpy as jnp
from jax.experimental import pallas as pl
from jax.experimental.pallas import tpu as pltpu

BN_EPS = 1e-5


def gcn_kernel(adj_ref, x_ref,
               w1_ref, aux1_ref,
               w2_ref, aux2_ref,
               wf_ref, bf_ref,
               out_ref, *, n_valid):
    bt, n, _ = x_ref.shape

    # Upcast the (lossless) bf16 adjacency once; everything downstream is f32 on the MXU.
    adj = adj_ref[...].astype(jnp.float32)                           # (Bt, N, N)
    # s = rsqrt(deg), deg = rowsum(A) + 1 (self-loop); deg >= 1 so rsqrt is safe (EUP op).
    s = jax.lax.rsqrt(jnp.sum(adj, axis=-1, keepdims=True) + 1.0)    # (Bt, N, 1)
    s2 = s * s
    # Fold D^-1/2 into the adjacency once; amortized across both GCN layers.
    a_norm = adj * s * jnp.swapaxes(s, -1, -2)                       # (Bt, N, N)

    def gcn_layer(h, w_ref, aux_ref):
        # A_hat @ h = D^-1/2 (A + I) D^-1/2 @ h = a_norm @ h + s^2 * h
        ah = jnp.einsum("bij,bjf->bif", a_norm, h,
                        preferred_element_type=jnp.float32)
        h = ah + s2 * h                                              # (Bt, N, Fin)
        f_in = h.shape[-1]
        f_out = w_ref.shape[-1]
        # Stack all graphs of the block into one (Bt*N, Fin) @ (Fin, Fout) matmul.
        # N is padded to a multiple of 8 in the wrapper so this reshape is layout-free.
        h2 = jnp.dot(h.reshape(bt * n, f_in), w_ref[...],
                     preferred_element_type=jnp.float32)
        h2 = jnp.maximum(h2 + aux_ref[0:1, :], 0.0)                  # bias + ReLU
        h2 = h2 * aux_ref[1:2, :] + aux_ref[2:3, :]                  # folded eval BN
        # TODO(synk): dropout is identity (eval mode); training-mode dropout not implemented.
        return h2.reshape(bt, n, f_out)

    h = gcn_layer(x_ref[...], w1_ref, aux1_ref)
    h = gcn_layer(h, w2_ref, aux2_ref)

    # Mask out padded nodes (static condition; no-op when N was already a multiple of 8).
    if n_valid != n:
        node_ok = jax.lax.broadcasted_iota(jnp.int32, (1, n, 1), 1) < n_valid
        h = jnp.where(node_ok, h, 0.0)

    # Mean over nodes is folded into wf (pre-scaled by 1/n_valid in the wrapper), so a
    # plain sum suffices.  Final linear is lane-dense: (Bt, H) @ (H, 128) -> (Bt, 128).
    m = jnp.sum(h, axis=1)                                           # (Bt, H)
    out_ref[...] = (jnp.dot(m, wf_ref[...], preferred_element_type=jnp.float32)
                    + bf_ref[...])


def _pick_block_b(batch):
    """Graphs per grid step.

    Prefer a multiple of 8 (sublane-aligned output block) that leaves the grid with at
    least 2 steps so v7x's two TensorCores both get work.  Batches too small to split
    while keeping 8-row alignment just use a single step."""
    if batch < 16:
        return batch
    for bt in (64, 32, 16, 8):
        if batch % bt == 0 and batch // bt >= 2:
            return bt
    return batch


def gcn_forward(x, adj, params, block_b=None):
    B, N, Fin = x.shape
    H = params["w1"].shape[1]
    OUT = params["wf"].shape[1]

    # Pad nodes to a multiple of 8 so in-kernel reshapes stay layout-preserving.
    N_pad = ((N + 7) // 8) * 8
    if N_pad != N:
        x = jnp.pad(x, ((0, 0), (0, N_pad - N), (0, 0)))
        adj = jnp.pad(adj, ((0, 0), (0, N_pad - N), (0, N_pad - N)))

    # Lossless bf16 adjacency (values in {0, 0.5, 1.0}) halves the dominant HBM DMA.
    adj = adj.astype(jnp.bfloat16)

    if block_b is None:
        block_b = _pick_block_b(B)
    assert B % block_b == 0
    n_steps = B // block_b

    # Lane-dense output: pad the final linear to 128 lanes; slice [:, :OUT] after the call.
    OUT_PAD = max(128, ((OUT + 127) // 128) * 128)
    wf = jnp.pad(params["wf"] / float(N), ((0, 0), (0, OUT_PAD - OUT)))  # folds mean's 1/N
    bf = jnp.pad(params["bf"], ((0, 0), (0, OUT_PAD - OUT)))

    # Fold eval-mode BatchNorm into scale/shift and pack (bias, scale, shift) -> (3, H).
    def pack_aux(b, g, be, rm, rv):
        scale = g * jax.lax.rsqrt(rv + BN_EPS)
        shift = be - rm * scale
        return jnp.concatenate([b, scale, shift], axis=0)            # (3, H)

    aux1 = pack_aux(params["b1"], params["g1"], params["be1"],
                    params["rm1"], params["rv1"])
    aux2 = pack_aux(params["b2"], params["g2"], params["be2"],
                    params["rm2"], params["rv2"])

    def full(shape):
        nd = len(shape)
        return pl.BlockSpec(shape, lambda b, _nd=nd: (0,) * _nd)

    in_specs = [
        pl.BlockSpec((block_b, N_pad, N_pad), lambda b: (b, 0, 0)),  # adj block (bf16)
        pl.BlockSpec((block_b, N_pad, Fin), lambda b: (b, 0, 0)),    # x block
        full((Fin, H)), full((3, H)),                                # layer 1
        full((H, H)), full((3, H)),                                  # layer 2
        full((H, OUT_PAD)), full((1, OUT_PAD)),                      # final linear (padded)
    ]

    # VMEM budget: double-buffered adj+x blocks, resident weights, output block, and the
    # in-kernel f32 temporaries (a_norm + per-layer h).  Clamped below v7x's 64 MiB VMEM.
    est = 2 * block_b * (N_pad * N_pad * 2 + N_pad * Fin * 4)        # pipelined inputs
    est += (Fin * H + H * H + H * OUT_PAD + 6 * H + OUT_PAD) * 4      # resident params
    est += 2 * block_b * OUT_PAD * 4                                  # pipelined output
    est += block_b * N_pad * N_pad * 4                                # f32 a_norm temp
    est += 4 * block_b * N_pad * max(Fin, H) * 4                      # h temporaries
    vmem_limit = int(min(48 << 20, max(32 << 20, 2 * est + (4 << 20))))

    # Advisory cost estimate for XLA's scheduler around the custom call.
    flops = (2 * B * N_pad * N_pad * (Fin + H)            # two graph aggregations
             + 2 * B * N_pad * (Fin * H + H * H)          # two stacked linears
             + 2 * B * H * OUT_PAD)                       # final linear
    bytes_accessed = (adj.size * 2 + x.size * 4
                      + n_steps * (Fin * H + H * H + H * OUT_PAD + 6 * H + OUT_PAD) * 4
                      + B * OUT_PAD * 4)
    cost = pl.CostEstimate(flops=int(flops),
                           transcendentals=int(B * N_pad),
                           bytes_accessed=int(bytes_accessed))

    out = pl.pallas_call(
        functools.partial(gcn_kernel, n_valid=N),
        out_shape=jax.ShapeDtypeStruct((B, OUT_PAD), jnp.float32),
        grid=(n_steps,),
        in_specs=in_specs,
        out_specs=pl.BlockSpec((block_b, OUT_PAD), lambda b: (b, 0)),
        compiler_params=pltpu.CompilerParams(
            dimension_semantics=("parallel",),
            vmem_limit_bytes=vmem_limit),
        cost_estimate=cost,
    )(adj, x,
      params["w1"], aux1,
      params["w2"], aux2,
      wf, bf)
    return out[:, :OUT]


def gcn_reference(x, adj, params):
    """Pure-JAX reference mirroring the PyTorch forward (eval mode)."""
    N = adj.shape[-1]
    a_mod = adj + jnp.eye(N, dtype=adj.dtype)
    deg = jnp.sum(a_mod, axis=-1)
    dis = deg ** -0.5
    a_hat = a_mod * dis[..., :, None] * dis[..., None, :]

    def bn(h, g, be, rm, rv):
        return (h - rm) * jax.lax.rsqrt(rv + BN_EPS) * g + be

    h = jnp.einsum("bij,bjf->bif", a_hat, x)
    h = jnp.maximum(h @ params["w1"] + params["b1"], 0.0)
    h = bn(h, params["g1"], params["be1"], params["rm1"], params["rv1"])
    h = jnp.einsum("bij,bjf->bif", a_hat, h)
    h = jnp.maximum(h @ params["w2"] + params["b2"], 0.0)
    h = bn(h, params["g2"], params["be2"], params["rm2"], params["rv2"])
    h = jnp.mean(h, axis=1)
    return h @ params["wf"] + params["bf"]


def init_params(key, fin, hidden, out):
    keys = jax.random.split(key, 14)
    u = lambda k, s, lo=-0.3, hi=0.3: jax.random.uniform(k, s, jnp.float32, lo, hi)
    return {
        "w1": u(keys[0], (fin, hidden)),         "b1": u(keys[1], (1, hidden)),
        "g1": u(keys[2], (1, hidden), 0.8, 1.2), "be1": u(keys[3], (1, hidden)),
        "rm1": u(keys[4], (1, hidden)),          "rv1": u(keys[5], (1, hidden), 0.5, 1.5),
        "w2": u(keys[6], (hidden, hidden)),      "b2": u(keys[7], (1, hidden)),
        "g2": u(keys[8], (1, hidden), 0.8, 1.2), "be2": u(keys[9], (1, hidden)),
        "rm2": u(keys[10], (1, hidden)),         "rv2": u(keys[11], (1, hidden), 0.5, 1.5),
        "wf": u(keys[12], (hidden, out)),        "bf": u(keys[13], (1, out)),
    }


if __name__ == "__main__":
    B, N, FIN, HID, OUT = 2, 16, 8, 32, 4

    key = jax.random.PRNGKey(0)
    kx, kadj, kp = jax.random.split(key, 3)

    x = jax.random.normal(kx, (B, N, FIN), jnp.float32)
    # Build the adjacency the same way the PyTorch forward would (rand > 0.7, symmetrized).
    adj = (jax.random.uniform(kadj, (B, N, N)) > 0.7).astype(jnp.float32)
    adj = (adj + jnp.swapaxes(adj, -1, -2)) / 2.0

    params = init_params(kp, FIN, HID, OUT)

    out = jax.block_until_ready(gcn_forward(x, adj, params))
    ref = gcn_reference(x, adj, params)

    assert out.shape == (B, OUT), out.shape
    assert jnp.allclose(out, ref, rtol=1e-5, atol=1e-5), (out, ref)
    print("KERNEL_OK")
</pallas_src>

<mosaic_0001>
module attributes {stable_mosaic.version = 11 : i64} {
  func.func @gcn_kernel(%arg0: i32, %arg1: memref<2x16x16xbf16, #tpu.memory_space<vmem>>, %arg2: memref<2x16x8xf32, #tpu.memory_space<vmem>>, %arg3: memref<8x32xf32, #tpu.memory_space<vmem>>, %arg4: memref<3x32xf32, #tpu.memory_space<vmem>>, %arg5: memref<32x32xf32, #tpu.memory_space<vmem>>, %arg6: memref<3x32xf32, #tpu.memory_space<vmem>>, %arg7: memref<32x128xf32, #tpu.memory_space<vmem>>, %arg8: memref<1x128xf32, #tpu.memory_space<vmem>>, %arg9: memref<2x128xf32, #tpu.memory_space<vmem>>) attributes {dimension_semantics = [#tpu.dimension_semantics<parallel>], iteration_bounds = array<i64: 1>, scalar_prefetch = 0 : i64, scratch_operands = 0 : i64, tpu.core_type = #tpu.core_type<tc>, window_params = [{transform_indices = @transform_0, window_bounds = array<i64: 2, 16, 16>}, {transform_indices = @transform_1, window_bounds = array<i64: 2, 16, 8>}, {pipeline_mode = #tpu.pipeline_mode<synchronous>, transform_indices = @transform_2, window_bounds = array<i64: 8, 32>}, {pipeline_mode = #tpu.pipeline_mode<synchronous>, transform_indices = @transform_3, window_bounds = array<i64: 3, 32>}, {pipeline_mode = #tpu.pipeline_mode<synchronous>, transform_indices = @transform_4, window_bounds = array<i64: 32, 32>}, {pipeline_mode = #tpu.pipeline_mode<synchronous>, transform_indices = @transform_5, window_bounds = array<i64: 3, 32>}, {pipeline_mode = #tpu.pipeline_mode<synchronous>, transform_indices = @transform_6, window_bounds = array<i64: 32, 128>}, {pipeline_mode = #tpu.pipeline_mode<synchronous>, transform_indices = @transform_7, window_bounds = array<i64: 1, 128>}, {transform_indices = @transform_8, window_bounds = array<i64: 2, 128>}]} {
    %c0 = arith.constant 0 : index
    %c0_0 = arith.constant 0 : index
    %c0_1 = arith.constant 0 : index
    %0 = vector.load %arg1[%c0, %c0_0, %c0_1] : memref<2x16x16xbf16, #tpu.memory_space<vmem>>, vector<2x16x16xbf16>
    %1 = arith.extf %0 : vector<2x16x16xbf16> to vector<2x16x16xf32>
    %cst = arith.constant dense<0.000000e+00> : vector<2x16xf32>
    %2 = vector.multi_reduction <add>, %1, %cst [2] : vector<2x16x16xf32> to vector<2x16xf32>
    %3 = vector.shape_cast %2 : vector<2x16xf32> to vector<2x16x1xf32>
    %cst_2 = arith.constant 1.000000e+00 : f32
    %4 = vector.broadcast %cst_2 : f32 to vector<2x16x1xf32>
    %5 = arith.addf %3, %4 : vector<2x16x1xf32>
    %6 = math.rsqrt %5 : vector<2x16x1xf32>
    %7 = arith.mulf %6, %6 : vector<2x16x1xf32>
    %8 = vector.broadcast %6 : vector<2x16x1xf32> to vector<2x16x16xf32>
    %9 = arith.mulf %1, %8 : vector<2x16x16xf32>
    %10 = tpu.transpose %6, [0, 2, 1] : vector<2x16x1xf32> -> vector<2x1x16xf32>
    %11 = vector.broadcast %10 : vector<2x1x16xf32> to vector<2x16x16xf32>
    %12 = arith.mulf %9, %11 : vector<2x16x16xf32>
    %c0_3 = arith.constant 0 : index
    %c0_4 = arith.constant 0 : index
    %c0_5 = arith.constant 0 : index
    %13 = vector.load %arg2[%c0_3, %c0_4, %c0_5] : memref<2x16x8xf32, #tpu.memory_space<vmem>>, vector<2x16x8xf32>
    "tpu.trace_start"() <{level = 10 : i32, message = "bij,bjf->bif"}> : () -> ()
    %cst_6 = arith.constant dense<0.000000e+00> : vector<2x16x8xf32>
    %14 = tpu.matmul %12, %13, %cst_6 {dimension_numbers = #tpu.dot_dimension_numbers<[2], [1], [1], [2], [0, 0, 0, 1, 1, 2], [0], [0]>} : vector<2x16x16xf32>, vector<2x16x8xf32>, vector<2x16x8xf32> -> vector<2x16x8xf32>
    "tpu.trace_stop"() : () -> ()
    %15 = vector.broadcast %7 : vector<2x16x1xf32> to vector<2x16x8xf32>
    %16 = arith.mulf %15, %13 : vector<2x16x8xf32>
    %17 = arith.addf %14, %16 : vector<2x16x8xf32>
    %18 = vector.shape_cast %17 : vector<2x16x8xf32> to vector<32x8xf32>
    %c0_7 = arith.constant 0 : index
    %c0_8 = arith.constant 0 : index
    %19 = vector.load %arg3[%c0_7, %c0_8] : memref<8x32xf32, #tpu.memory_space<vmem>>, vector<8x32xf32>
    %cst_9 = arith.constant dense<0.000000e+00> : vector<32x32xf32>
    %20 = tpu.matmul %18, %19, %cst_9 {dimension_numbers = #tpu.dot_dimension_numbers<[1], [0], [0], [1], [0, 0, 1, 1], [], []>} : vector<32x8xf32>, vector<8x32xf32>, vector<32x32xf32> -> vector<32x32xf32>
    %c0_10 = arith.constant 0 : index
    %c0_11 = arith.constant 0 : index
    %21 = vector.load %arg4[%c0_10, %c0_11] : memref<3x32xf32, #tpu.memory_space<vmem>>, vector<1x32xf32>
    %22 = vector.broadcast %21 : vector<1x32xf32> to vector<32x32xf32>
    %23 = arith.addf %20, %22 : vector<32x32xf32>
    %cst_12 = arith.constant 0.000000e+00 : f32
    %24 = vector.broadcast %cst_12 : f32 to vector<32x32xf32>
    %25 = arith.maximumf %23, %24 : vector<32x32xf32>
    %c1 = arith.constant 1 : index
    %c0_13 = arith.constant 0 : index
    %26 = vector.load %arg4[%c1, %c0_13] : memref<3x32xf32, #tpu.memory_space<vmem>>, vector<1x32xf32>
    %27 = vector.broadcast %26 : vector<1x32xf32> to vector<32x32xf32>
    %28 = arith.mulf %25, %27 : vector<32x32xf32>
    %c2 = arith.constant 2 : index
    %c0_14 = arith.constant 0 : index
    %29 = vector.load %arg4[%c2, %c0_14] : memref<3x32xf32, #tpu.memory_space<vmem>>, vector<1x32xf32>
    %30 = vector.broadcast %29 : vector<1x32xf32> to vector<32x32xf32>
    %31 = arith.addf %28, %30 : vector<32x32xf32>
    %32 = vector.shape_cast %31 : vector<32x32xf32> to vector<2x16x32xf32>
    "tpu.trace_start"() <{level = 10 : i32, message = "bij,bjf->bif"}> : () -> ()
    %cst_15 = arith.constant dense<0.000000e+00> : vector<2x16x32xf32>
    %33 = tpu.matmul %12, %32, %cst_15 {dimension_numbers = #tpu.dot_dimension_numbers<[2], [1], [1], [2], [0, 0, 0, 1, 1, 2], [0], [0]>} : vector<2x16x16xf32>, vector<2x16x32xf32>, vector<2x16x32xf32> -> vector<2x16x32xf32>
    "tpu.trace_stop"() : () -> ()
    %34 = vector.broadcast %7 : vector<2x16x1xf32> to vector<2x16x32xf32>
    %35 = arith.mulf %34, %32 : vector<2x16x32xf32>
    %36 = arith.addf %33, %35 : vector<2x16x32xf32>
    %37 = vector.shape_cast %36 : vector<2x16x32xf32> to vector<32x32xf32>
    %c0_16 = arith.constant 0 : index
    %c0_17 = arith.constant 0 : index
    %38 = vector.load %arg5[%c0_16, %c0_17] : memref<32x32xf32, #tpu.memory_space<vmem>>, vector<32x32xf32>
    %cst_18 = arith.constant dense<0.000000e+00> : vector<32x32xf32>
    %39 = tpu.matmul %37, %38, %cst_18 {dimension_numbers = #tpu.dot_dimension_numbers<[1], [0], [0], [1], [0, 0, 1, 1], [], []>} : vector<32x32xf32>, vector<32x32xf32>, vector<32x32xf32> -> vector<32x32xf32>
    %c0_19 = arith.constant 0 : index
    %c0_20 = arith.constant 0 : index
    %40 = vector.load %arg6[%c0_19, %c0_20] : memref<3x32xf32, #tpu.memory_space<vmem>>, vector<1x32xf32>
    %41 = vector.broadcast %40 : vector<1x32xf32> to vector<32x32xf32>
    %42 = arith.addf %39, %41 : vector<32x32xf32>
    %cst_21 = arith.constant 0.000000e+00 : f32
    %43 = vector.broadcast %cst_21 : f32 to vector<32x32xf32>
    %44 = arith.maximumf %42, %43 : vector<32x32xf32>
    %c1_22 = arith.constant 1 : index
    %c0_23 = arith.constant 0 : index
    %45 = vector.load %arg6[%c1_22, %c0_23] : memref<3x32xf32, #tpu.memory_space<vmem>>, vector<1x32xf32>
    %46 = vector.broadcast %45 : vector<1x32xf32> to vector<32x32xf32>
    %47 = arith.mulf %44, %46 : vector<32x32xf32>
    %c2_24 = arith.constant 2 : index
    %c0_25 = arith.constant 0 : index
    %48 = vector.load %arg6[%c2_24, %c0_25] : memref<3x32xf32, #tpu.memory_space<vmem>>, vector<1x32xf32>
    %49 = vector.broadcast %48 : vector<1x32xf32> to vector<32x32xf32>
    %50 = arith.addf %47, %49 : vector<32x32xf32>
    %51 = vector.shape_cast %50 : vector<32x32xf32> to vector<2x16x32xf32>
    %cst_26 = arith.constant dense<0.000000e+00> : vector<2x32xf32>
    %52 = vector.multi_reduction <add>, %51, %cst_26 [1] : vector<2x16x32xf32> to vector<2x32xf32>
    %c0_27 = arith.constant 0 : index
    %c0_28 = arith.constant 0 : index
    %53 = vector.load %arg7[%c0_27, %c0_28] : memref<32x128xf32, #tpu.memory_space<vmem>>, vector<32x128xf32>
    %cst_29 = arith.constant dense<0.000000e+00> : vector<2x128xf32>
    %54 = tpu.matmul %52, %53, %cst_29 {dimension_numbers = #tpu.dot_dimension_numbers<[1], [0], [0], [1], [0, 0, 1, 1], [], []>} : vector<2x32xf32>, vector<32x128xf32>, vector<2x128xf32> -> vector<2x128xf32>
    %c0_30 = arith.constant 0 : index
    %c0_31 = arith.constant 0 : index
    %55 = vector.load %arg8[%c0_30, %c0_31] : memref<1x128xf32, #tpu.memory_space<vmem>>, vector<1x128xf32>
    %56 = vector.broadcast %55 : vector<1x128xf32> to vector<2x128xf32>
    %57 = arith.addf %54, %56 : vector<2x128xf32>
    %c0_32 = arith.constant 0 : index
    %c0_33 = arith.constant 0 : index
    %58 = vector.load %arg9[%c0_32, %c0_33] : memref<2x128xf32, #tpu.memory_space<vmem>>, vector<2x128xf32>
    tpu.vector_store %arg9[%c0_32, %c0_33], %57 {strides = array<i32>} : memref<2x128xf32, #tpu.memory_space<vmem>>, vector<2x128xf32>,
    return
  }
  func.func @transform_0(%arg0: i32) -> (i32, i32, i32) {
    %c0_i32 = arith.constant 0 : i32
    %c0_i32_0 = arith.constant 0 : i32
    %c0_i32_1 = arith.constant 0 : i32
    return %arg0, %c0_i32, %c0_i32_0 : i32, i32, i32
  }
  func.func @transform_1(%arg0: i32) -> (i32, i32, i32) {
    %c0_i32 = arith.constant 0 : i32
    %c0_i32_0 = arith.constant 0 : i32
    %c0_i32_1 = arith.constant 0 : i32
    return %arg0, %c0_i32, %c0_i32_0 : i32, i32, i32
  }
  func.func @transform_2(%arg0: i32) -> (i32, i32) {
    %c0_i32 = arith.constant 0 : i32
    %c0_i32_0 = arith.constant 0 : i32
    %c0_i32_1 = arith.constant 0 : i32
    return %c0_i32, %c0_i32_0 : i32, i32
  }
  func.func @transform_3(%arg0: i32) -> (i32, i32) {
    %c0_i32 = arith.constant 0 : i32
    %c0_i32_0 = arith.constant 0 : i32
    %c0_i32_1 = arith.constant 0 : i32
    return %c0_i32, %c0_i32_0 : i32, i32
  }
  func.func @transform_4(%arg0: i32) -> (i32, i32) {
    %c0_i32 = arith.constant 0 : i32
    %c0_i32_0 = arith.constant 0 : i32
    %c0_i32_1 = arith.constant 0 : i32
    return %c0_i32, %c0_i32_0 : i32, i32
  }
  func.func @transform_5(%arg0: i32) -> (i32, i32) {
    %c0_i32 = arith.constant 0 : i32
    %c0_i32_0 = arith.constant 0 : i32
    %c0_i32_1 = arith.constant 0 : i32
    return %c0_i32, %c0_i32_0 : i32, i32
  }
  func.func @transform_6(%arg0: i32) -> (i32, i32) {
    %c0_i32 = arith.constant 0 : i32
    %c0_i32_0 = arith.constant 0 : i32
    %c0_i32_1 = arith.constant 0 : i32
    return %c0_i32, %c0_i32_0 : i32, i32
  }
  func.func @transform_7(%arg0: i32) -> (i32, i32) {
    %c0_i32 = arith.constant 0 : i32
    %c0_i32_0 = arith.constant 0 : i32
    %c0_i32_1 = arith.constant 0 : i32
    return %c0_i32, %c0_i32_0 : i32, i32
  }
  func.func @transform_8(%arg0: i32) -> (i32, i32) {
    %c0_i32 = arith.constant 0 : i32
    %c0_i32_0 = arith.constant 0 : i32
    return %arg0, %c0_i32 : i32, i32
  }
}

</mosaic_0001>

<llo_original>
// kernel: tpu_custom_call.1
$region0: #{tpu_custom_call.1}
  #allocation0 [shape = 'u32[]', space=smem, size = 0x4, offset = 0x4, fixed_abs, tag = 'smem constant byte address 0x4 - core index']
  #allocation1 [shape = 'u32[144,128]{1,0:T(1,128)}', space=vmem, size = 0x12000, scoped, tag = 'internal scratch']
  %s0 = inlined_call_operand.vmem [shape: bf16[2,16,16], index: 0, kind: input, shape index: {}]
  %s1 = inlined_call_operand.vmem [shape: f32[2,16,8], index: 1, kind: input, shape index: {}]
  %s2 = inlined_call_operand.hbm [shape: f32[8,32], index: 2, kind: input, shape index: {}]
  %s3 = inlined_call_operand.vmem [shape: f32[3,32], index: 3, kind: input, shape index: {}]
  %s4 = inlined_call_operand.vmem [shape: f32[32,32], index: 4, kind: input, shape index: {}]
  %s5 = inlined_call_operand.vmem [shape: f32[3,32], index: 5, kind: input, shape index: {}]
  %s6 = inlined_call_operand.hbm [shape: f32[32,128], index: 6, kind: input, shape index: {}]
  %s7 = inlined_call_operand.vmem [shape: f32[1,128], index: 7, kind: input, shape index: {}]
  %s8 = inlined_call_operand.hbm [shape: f32[2,128], index: 8, kind: output, shape index: {}]
  %s9 = sld [smem:[#allocation0]]
  $region50: #{tpu_custom_call.1} parent=0
    _
  %s11 = ssub.s32 1, %s9
  %s12 = scalar_select 0, %s11, %s9
  $region1: #{tpu_custom_call.1} parent=0
    #allocation2 [shape = 'u8[4096]{0}', space=vmem, size = 0x1000, scoped, tag = 'input window, operand 2, single buffered']
    #allocation3 [shape = 's32[1]{0}', space=sflag, size = 0x4, scoped, tag = 'scoped memory for tpu_custom_call.1']
    #allocation4 [shape = 's32[1]{0}', space=sflag, size = 0x4, scoped, tag = 'scoped memory for tpu_custom_call.1']
    #allocation5 [shape = 'u8[16384]{0}', space=vmem, size = 0x4000, scoped, tag = 'input window, operand 6, single buffered']
    #allocation6 [shape = 's32[1]{0}', space=sflag, size = 0x4, scoped, tag = 'scoped memory for tpu_custom_call.1']
    #allocation7 [shape = 'u8[1024]{0}', space=vmem, size = 0x400, scoped, tag = 'output window, operand 0, single buffered']
    %13 = vsyncpa [#allocation3], 0
    %14 = vsyncpa [#allocation6], 0
    %15 = vsyncpa [#allocation4], 0
    // Predicated region
    $region2: #{tpu_custom_call.1} parent=1 // pred_check
      _
    $region3: #{tpu_custom_call.1} parent=1 // pred_check_branch
      %17 = sbr.rel (0) target = $region5
    $region4: #{tpu_custom_call.1} parent=1 // pred_region
      _
    $region5: #{tpu_custom_call.1} parent=1 // pred_fallthru
      _
    // Predicated region
    $region6: #{tpu_custom_call.1} parent=1 // pred_check
      _
    $region7: #{tpu_custom_call.1} parent=1 // pred_check_branch
      %19 = sbr.rel (0) target = $region9
    $region8: #{tpu_custom_call.1} parent=1 // pred_region
      _
    $region9: #{tpu_custom_call.1} parent=1 // pred_fallthru
      _
    // Predicated region
    $region10: #{tpu_custom_call.1} parent=1 // pred_check
      _
    $region11: #{tpu_custom_call.1} parent=1 // pred_check_branch
      %21 = sbr.rel (0) target = $region13
    $region12: #{tpu_custom_call.1} parent=1 // pred_region
      %s23 = ssub.s32 128, 128
      %24 = vsyncadd [#allocation3], %s23
      %s26 = sshll.u32 [#allocation2], 4
      %s27 = int_to_ptr.vmem [resolvable:$true] %s26
      %29 = dma.hbm_to_vmem [thread:$0]  %s2, 128, %s27, [#allocation3]
    $region13: #{tpu_custom_call.1} parent=1 // pred_fallthru
      _
    // Predicated region
    $region14: #{tpu_custom_call.1} parent=1 // pred_check
      _
    $region15: #{tpu_custom_call.1} parent=1 // pred_check_branch
      %31 = sbr.rel (0) target = $region17
    $region16: #{tpu_custom_call.1} parent=1 // pred_region
      _
    $region17: #{tpu_custom_call.1} parent=1 // pred_fallthru
      _
    // Predicated region
    $region18: #{tpu_custom_call.1} parent=1 // pred_check
      _
    $region19: #{tpu_custom_call.1} parent=1 // pred_check_branch
      %33 = sbr.rel (0) target = $region21
    $region20: #{tpu_custom_call.1} parent=1 // pred_region
      _
    $region21: #{tpu_custom_call.1} parent=1 // pred_fallthru
      _
    // Predicated region
    $region22: #{tpu_custom_call.1} parent=1 // pred_check
      _
    $region23: #{tpu_custom_call.1} parent=1 // pred_check_branch
      %35 = sbr.rel (0) target = $region25
    $region24: #{tpu_custom_call.1} parent=1 // pred_region
      _
    $region25: #{tpu_custom_call.1} parent=1 // pred_fallthru
      _
    // Predicated region
    $region26: #{tpu_custom_call.1} parent=1 // pred_check
      _
    $region27: #{tpu_custom_call.1} parent=1 // pred_check_branch
      %37 = sbr.rel (0) target = $region29
    $region28: #{tpu_custom_call.1} parent=1 // pred_region
      %s39 = ssub.s32 512, 512
      %40 = vsyncadd [#allocation6], %s39
      %s41 = sshll.u32 [#allocation5], 4
      %s42 = int_to_ptr.vmem [resolvable:$true] %s41
      %47 = dma.hbm_to_vmem [thread:$0]  %s6, 512, %s42, [#allocation6], 128, 128, 8
    $region29: #{tpu_custom_call.1} parent=1 // pred_fallthru
      _
    // Predicated region
    $region30: #{tpu_custom_call.1} parent=1 // pred_check
      _
    $region31: #{tpu_custom_call.1} parent=1 // pred_check_branch
      %49 = sbr.rel (0) target = $region33
    $region32: #{tpu_custom_call.1} parent=1 // pred_region
      _
    $region33: #{tpu_custom_call.1} parent=1 // pred_fallthru
      _
    // Predicated region
    $region34: #{tpu_custom_call.1} parent=1 // pred_check
      _
    $region35: #{tpu_custom_call.1} parent=1 // pred_check_branch
      %51 = sbr.rel (0) target = $region37
    $region36: #{tpu_custom_call.1} parent=1 // pred_region
      %52 = dma.done [#allocation3], 128
    $region37: #{tpu_custom_call.1} parent=1 // pred_fallthru
      _
    // Predicated region
    $region38: #{tpu_custom_call.1} parent=1 // pred_check
      _
    $region39: #{tpu_custom_call.1} parent=1 // pred_check_branch
      %54 = sbr.rel (0) target = $region41
    $region40: #{tpu_custom_call.1} parent=1 // pred_region
      %55 = dma.done [#allocation6], 512
    $region41: #{tpu_custom_call.1} parent=1 // pred_fallthru
      _
    %v56 = vld [vmem:[%s0] sm:$0xf]
    %v57 = vld [vmem:[%s0 + $0x4] sm:$0xf]
    %v58 = vld [vmem:[%s0 + $0x8] sm:$0xf]
    %v59 = vld [vmem:[%s0 + $0xc] sm:$0xf]
    %v60 = vunpack.c.l.bf16 %v56
    %v61 = vunpack.c.l.bf16 %v57
    %v62 = vunpack.c.l.bf16 %v58
    %v63 = vunpack.c.l.bf16 %v59
    %vm64 = vcmask 130048
    %v65 = vsel %vm64, %v60, 0.0
    %66 = vadd.xlane.f32.xlu0 %v65
    %v67 = vpop.xlane.xlu0 %66
    %v68 = vsel %vm64, %v61, 0.0
    %69 = vadd.xlane.f32.xlu0 %v68
    %v70 = vpop.xlane.xlu0 %69
    %v71 = vsel %vm64, %v62, 0.0
    %72 = vadd.xlane.f32.xlu0 %v71
    %v73 = vpop.xlane.xlu0 %72
    %v74 = vsel %vm64, %v63, 0.0
    %75 = vadd.xlane.f32.xlu0 %v74
    %v76 = vpop.xlane.xlu0 %75
    %v77 = vadd.f32 %v67, 1.0
    %v78 = vadd.f32 %v70, 1.0
    %v79 = vadd.f32 %v73, 1.0
    %v80 = vadd.f32 %v76, 1.0
    %v81 = vrsqrt.pop %v77
    %v82 = vrsqrt.pop %v78
    %v83 = vrsqrt.pop %v79
    %v84 = vrsqrt.pop %v80
    %v85 = vmul.f32 %v81, %v81
    %v86 = vmul.f32 %v82, %v82
    %v87 = vmul.f32 %v83, %v83
    %v88 = vmul.f32 %v84, %v84
    %v89 = vmul.f32 %v60, %v81
    %v90 = vmul.f32 %v61, %v82
    %v91 = vmul.f32 %v62, %v83
    %v92 = vmul.f32 %v63, %v84
    %93 = vxpose.xlu0.b32.start [1/16] %v81, 128
    %94 = vxpose.xlu0.b32.cont [2/16] %v82, 128
    %95 = vxpose.xlu0.b32.cont [3/16] 0.0, 128
    %96 = vxpose.xlu0.b32.cont [4/16] 0.0, 128
    %97 = vxpose.xlu0.b32.cont [5/16] 0.0, 128
    %98 = vxpose.xlu0.b32.cont [6/16] 0.0, 128
    %99 = vxpose.xlu0.b32.cont [7/16] 0.0, 128
    %100 = vxpose.xlu0.b32.cont [8/16] 0.0, 128
    %101 = vxpose.xlu0.b32.cont [9/16] 0.0, 128
    %102 = vxpose.xlu0.b32.cont [10/16] 0.0, 128
    %103 = vxpose.xlu0.b32.cont [11/16] 0.0, 128
    %104 = vxpose.xlu0.b32.cont [12/16] 0.0, 128
    %105 = vxpose.xlu0.b32.cont [13/16] 0.0, 128
    %106 = vxpose.xlu0.b32.cont [14/16] 0.0, 128
    %107 = vxpose.xlu0.b32.cont [15/16] 0.0, 128
    %108 = vxpose.xlu0.b32.end [16/16] 0.0, 128
    %v109 = vpop.trf.xlu0
    %v110 = vpop.trf.xlu0
    %v111 = vpop.trf.xlu0
    %v112 = vpop.trf.xlu0
    %v113 = vpop.trf.xlu0
    %v114 = vpop.trf.xlu0
    %v115 = vpop.trf.xlu0
    %v116 = vpop.trf.xlu0
    %v117 = vpop.trf.xlu0
    %v118 = vpop.trf.xlu0
    %v119 = vpop.trf.xlu0
    %v120 = vpop.trf.xlu0
    %v121 = vpop.trf.xlu0
    %v122 = vpop.trf.xlu0
    %v123 = vpop.trf.xlu0
    %v124 = vpop.trf.xlu0
    %125 = vxpose.xlu0.b32.start [1/16] %v83, 128
    %126 = vxpose.xlu0.b32.cont [2/16] %v84, 128
    %127 = vxpose.xlu0.b32.cont [3/16] 0.0, 128
    %128 = vxpose.xlu0.b32.cont [4/16] 0.0, 128
    %129 = vxpose.xlu0.b32.cont [5/16] 0.0, 128
    %130 = vxpose.xlu0.b32.cont [6/16] 0.0, 128
    %131 = vxpose.xlu0.b32.cont [7/16] 0.0, 128
    %132 = vxpose.xlu0.b32.cont [8/16] 0.0, 128
    %133 = vxpose.xlu0.b32.cont [9/16] 0.0, 128
    %134 = vxpose.xlu0.b32.cont [10/16] 0.0, 128
    %135 = vxpose.xlu0.b32.cont [11/16] 0.0, 128
    %136 = vxpose.xlu0.b32.cont [12/16] 0.0, 128
    %137 = vxpose.xlu0.b32.cont [13/16] 0.0, 128
    %138 = vxpose.xlu0.b32.cont [14/16] 0.0, 128
    %139 = vxpose.xlu0.b32.cont [15/16] 0.0, 128
    %140 = vxpose.xlu0.b32.end [16/16] 0.0, 128
    %v141 = vpop.trf.xlu0
    %v142 = vpop.trf.xlu0
    %v143 = vpop.trf.xlu0
    %v144 = vpop.trf.xlu0
    %v145 = vpop.trf.xlu0
    %v146 = vpop.trf.xlu0
    %v147 = vpop.trf.xlu0
    %v148 = vpop.trf.xlu0
    %v149 = vpop.trf.xlu0
    %v150 = vpop.trf.xlu0
    %v151 = vpop.trf.xlu0
    %v152 = vpop.trf.xlu0
    %v153 = vpop.trf.xlu0
    %v154 = vpop.trf.xlu0
    %v155 = vpop.trf.xlu0
    %v156 = vpop.trf.xlu0
    %v157 = vlaneseq
    %v158 = vshrl.u32 %v157, 7
    %v159 = vsub.s32 0, %v158
    %v160 = vrot.slane %v109, %v159
    %v161 = vlaneseq
    %v162 = vshrl.u32 %v161, 7
    %v163 = vsub.s32 0, %v162
    %v164 = vrot.slane %v141, %v163
    %v165 = vmul.f32 %v89, %v160
    %v166 = vmul.f32 %v90, %v160
    %v167 = vmul.f32 %v91, %v164
    %v168 = vmul.f32 %v92, %v164
    %v169 = vld [vmem:[%s1] sm:$0xff]
    %v170 = vld [vmem:[%s1 + $0x8] sm:$0xff]
    %v171 = vld [vmem:[%s1 + $0x10] sm:$0xff]
    %v172 = vld [vmem:[%s1 + $0x18] sm:$0xff]
    %v173 = vmul.f32 %v85, %v169
    %v174 = vmul.f32 %v86, %v170
    %v175 = vmul.f32 %v87, %v171
    %v176 = vmul.f32 %v88, %v172
    %v178 = vsel %vm64, %v165, 0
    %v181 = vsel %vm64, %v166, 0
    %183 = vmatprep.subr.mxu0 0.0
    %184 = vmatpush1.msra.mxu0 0.0
    %185 = vmatprep.subr.mxu0 0.0
    %186 = vmatpush1.msra.mxu0 0.0
    %187 = vmatprep.subr.mxu0 0.0
    %188 = vmatpush1.msra.mxu0 0.0
    %189 = vmatprep.subr.mxu0 0.0
    %190 = vmatpush1.msra.mxu0 0.0
    %191 = vmatprep.subr.mxu0 0.0
    %192 = vmatpush1.msra.mxu0 0.0
    %193 = vmatprep.subr.mxu0 0.0
    %194 = vmatpush1.msra.mxu0 0.0
    %195 = vmatprep.subr.mxu0 0.0
    %196 = vmatpush1.msra.mxu0 0.0
    %197 = vmatprep.subr.mxu0 0.0
    %198 = vmatpush1.msra.mxu0 0.0
    %199 = vmatprep.subr.mxu0 0.0
    %200 = vmatpush1.msra.mxu0 0.0
    %201 = vmatprep.subr.mxu0 0.0
    %202 = vmatpush1.msra.mxu0 0.0
    %203 = vmatprep.subr.mxu0 0.0
    %204 = vmatpush1.msra.mxu0 0.0
    %205 = vmatprep.subr.mxu0 0.0
    %206 = vmatpush1.msra.mxu0 0.0
    %207 = vmatprep.subr.mxu0 0.0
    %208 = vmatpush1.msra.mxu0 0.0
    %209 = vmatprep.subr.mxu0 0.0
    %210 = vmatpush1.msra.mxu0 0.0
    %211 = vmatprep.subr.mxu0 0.0
    %212 = vmatpush1.msra.mxu0 %v170
    %213 = vmatprep.subr.mxu0 0.0
    %214 = vmatpush1.msra.mxu0 %v169
    %215 = vmatprep.subr.mxu0 0.0
    %216 = vmatpush2.msra.mxu0 0.0
    %217 = vmatprep.subr.mxu0 0.0
    %218 = vmatpush2.msra.mxu0 0.0
    %219 = vmatprep.subr.mxu0 0.0
    %220 = vmatpush2.msra.mxu0 0.0
    %221 = vmatprep.subr.mxu0 0.0
    %222 = vmatpush2.msra.mxu0 0.0
    %223 = vmatprep.subr.mxu0 0.0
    %224 = vmatpush2.msra.mxu0 0.0
    %225 = vmatprep.subr.mxu0 0.0
    %226 = vmatpush2.msra.mxu0 0.0
    %227 = vmatprep.subr.mxu0 0.0
    %228 = vmatpush2.msra.mxu0 0.0
    %229 = vmatprep.subr.mxu0 0.0
    %230 = vmatpush2.msra.mxu0 0.0
    %231 = vmatprep.subr.mxu0 0.0
    %232 = vmatpush2.msra.mxu0 0.0
    %233 = vmatprep.subr.mxu0 0.0
    %234 = vmatpush2.msra.mxu0 0.0
    %235 = vmatprep.subr.mxu0 0.0
    %236 = vmatpush2.msra.mxu0 0.0
    %237 = vmatprep.subr.mxu0 0.0
    %238 = vmatpush2.msra.mxu0 0.0
    %239 = vmatprep.subr.mxu0 0.0
    %240 = vmatpush2.msra.mxu0 0.0
    %241 = vmatprep.subr.mxu0 0.0
    %242 = vmatpush2.msra.mxu0 0.0
    %243 = vmatprep.subr.mxu0 0.0
    %244 = vmatpush2.msra.mxu0 0.0
    %245 = vmatprep.subr.mxu0 0.0
    %246 = vmatpush2.msra.mxu0 0.0
    %247 = vmatprep.mubr.f32.mxu0 0.0
    %248 = vmatmul.mubr.f32.gmra.mxu0 %v178
    %v249 = vpop.f32.mrf.mxu0
    %v250 = vadd.f32 %v173, %v249
    %v251 = vpop.f32.mrf.mxu0
    %252 = vmatprep.mubr.f32.mxu0 0.0
    %253 = vmatmul.mubr.f32.gmra.mxu0 %v181
    %v254 = vpop.f32.mrf.mxu0
    %v255 = vadd.f32 %v174, %v254
    %v256 = vpop.f32.mrf.mxu0
    %257 = vdwg.mxu0
    %v259 = vsel %vm64, %v167, 0
    %v262 = vsel %vm64, %v168, 0
    %264 = vmatprep.subr.mxu0 0.0
    %265 = vmatpush1.msra.mxu0 0.0
    %266 = vmatprep.subr.mxu0 0.0
    %267 = vmatpush1.msra.mxu0 0.0
    %268 = vmatprep.subr.mxu0 0.0
    %269 = vmatpush1.msra.mxu0 0.0
    %270 = vmatprep.subr.mxu0 0.0
    %271 = vmatpush1.msra.mxu0 0.0
    %272 = vmatprep.subr.mxu0 0.0
    %273 = vmatpush1.msra.mxu0 0.0
    %274 = vmatprep.subr.mxu0 0.0
    %275 = vmatpush1.msra.mxu0 0.0
    %276 = vmatprep.subr.mxu0 0.0
    %277 = vmatpush1.msra.mxu0 0.0
    %278 = vmatprep.subr.mxu0 0.0
    %279 = vmatpush1.msra.mxu0 0.0
    %280 = vmatprep.subr.mxu0 0.0
    %281 = vmatpush1.msra.mxu0 0.0
    %282 = vmatprep.subr.mxu0 0.0
    %283 = vmatpush1.msra.mxu0 0.0
    %284 = vmatprep.subr.mxu0 0.0
    %285 = vmatpush1.msra.mxu0 0.0
    %286 = vmatprep.subr.mxu0 0.0
    %287 = vmatpush1.msra.mxu0 0.0
    %288 = vmatprep.subr.mxu0 0.0
    %289 = vmatpush1.msra.mxu0 0.0
    %290 = vmatprep.subr.mxu0 0.0
    %291 = vmatpush1.msra.mxu0 0.0
    %292 = vmatprep.subr.mxu0 0.0
    %293 = vmatpush1.msra.mxu0 %v172
    %294 = vmatprep.subr.mxu0 0.0
    %295 = vmatpush1.msra.mxu0 %v171
    %296 = vmatprep.subr.mxu0 0.0
    %297 = vmatpush2.msra.mxu0 0.0
    %298 = vmatprep.subr.mxu0 0.0
    %299 = vmatpush2.msra.mxu0 0.0
    %300 = vmatprep.subr.mxu0 0.0
    %301 = vmatpush2.msra.mxu0 0.0
    %302 = vmatprep.subr.mxu0 0.0
    %303 = vmatpush2.msra.mxu0 0.0
    %304 = vmatprep.subr.mxu0 0.0
    %305 = vmatpush2.msra.mxu0 0.0
    %306 = vmatprep.subr.mxu0 0.0
    %307 = vmatpush2.msra.mxu0 0.0
    %308 = vmatprep.subr.mxu0 0.0
    %309 = vmatpush2.msra.mxu0 0.0
    %310 = vmatprep.subr.mxu0 0.0
    %311 = vmatpush2.msra.mxu0 0.0
    %312 = vmatprep.subr.mxu0 0.0
    %313 = vmatpush2.msra.mxu0 0.0
    %314 = vmatprep.subr.mxu0 0.0
    %315 = vmatpush2.msra.mxu0 0.0
    %316 = vmatprep.subr.mxu0 0.0
    %317 = vmatpush2.msra.mxu0 0.0
    %318 = vmatprep.subr.mxu0 0.0
    %319 = vmatpush2.msra.mxu0 0.0
    %320 = vmatprep.subr.mxu0 0.0
    %321 = vmatpush2.msra.mxu0 0.0
    %322 = vmatprep.subr.mxu0 0.0
    %323 = vmatpush2.msra.mxu0 0.0
    %324 = vmatprep.subr.mxu0 0.0
    %325 = vmatpush2.msra.mxu0 0.0
    %326 = vmatprep.subr.mxu0 0.0
    %327 = vmatpush2.msra.mxu0 0.0
    %328 = vmatprep.mubr.f32.mxu0 0.0
    %329 = vmatmul.mubr.f32.gmra.mxu0 %v259
    %v330 = vpop.f32.mrf.mxu0
    %v331 = vadd.f32 %v175, %v330
    %v332 = vpop.f32.mrf.mxu0
    %333 = vmatprep.mubr.f32.mxu0 0.0
    %334 = vmatmul.mubr.f32.gmra.mxu0 %v262
    %v335 = vpop.f32.mrf.mxu0
    %v336 = vadd.f32 %v176, %v335
    %v337 = vpop.f32.mrf.mxu0
    %338 = vdwg.mxu0
    %v339 = vld [vmem:[#allocation2] sm:$0xff]
    %v340 = vld [vmem:[%s3] sm:$0x1]
    %v341 = vlaneseq
    %v342 = vshrl.u32 %v341, 7
    %v343 = vsub.s32 0, %v342
    %v344 = vrot.slane %v340, %v343
    %vm345 = vcmask 64512
    %v347 = vsel %vm345, %v250, 0
    %v350 = vsel %vm345, %v255, 0
    %v353 = vsel %vm345, %v331, 0
    %v356 = vsel %vm345, %v336, 0
    %358 = vmatprep.subr.mxu0 0.0
    %359 = vmatpush1.msra.mxu0 0.0
    %360 = vmatprep.subr.mxu0 0.0
    %361 = vmatpush1.msra.mxu0 0.0
    %362 = vmatprep.subr.mxu0 0.0
    %363 = vmatpush1.msra.mxu0 0.0
    %364 = vmatprep.subr.mxu0 0.0
    %365 = vmatpush1.msra.mxu0 0.0
    %366 = vmatprep.subr.mxu0 0.0
    %367 = vmatpush1.msra.mxu0 0.0
    %368 = vmatprep.subr.mxu0 0.0
    %369 = vmatpush1.msra.mxu0 0.0
    %370 = vmatprep.subr.mxu0 0.0
    %371 = vmatpush1.msra.mxu0 0.0
    %372 = vmatprep.subr.mxu0 0.0
    %373 = vmatpush1.msra.mxu0 0.0
    %374 = vmatprep.subr.mxu0 0.0
    %375 = vmatpush1.msra.mxu0 0.0
    %376 = vmatprep.subr.mxu0 0.0
    %377 = vmatpush1.msra.mxu0 0.0
    %378 = vmatprep.subr.mxu0 0.0
    %379 = vmatpush1.msra.mxu0 0.0
    %380 = vmatprep.subr.mxu0 0.0
    %381 = vmatpush1.msra.mxu0 0.0
    %382 = vmatprep.subr.mxu0 0.0
    %383 = vmatpush1.msra.mxu0 0.0
    %384 = vmatprep.subr.mxu0 0.0
    %385 = vmatpush1.msra.mxu0 0.0
    %386 = vmatprep.subr.mxu0 0.0
    %387 = vmatpush1.msra.mxu0 0.0
    %388 = vmatprep.subr.mxu0 0.0
    %389 = vmatpush1.msra.mxu0 %v339
    %390 = vmatprep.subr.mxu0 0.0
    %391 = vmatpush2.msra.mxu0 0.0
    %392 = vmatprep.subr.mxu0 0.0
    %393 = vmatpush2.msra.mxu0 0.0
    %394 = vmatprep.subr.mxu0 0.0
    %395 = vmatpush2.msra.mxu0 0.0
    %396 = vmatprep.subr.mxu0 0.0
    %397 = vmatpush2.msra.mxu0 0.0
    %398 = vmatprep.subr.mxu0 0.0
    %399 = vmatpush2.msra.mxu0 0.0
    %400 = vmatprep.subr.mxu0 0.0
    %401 = vmatpush2.msra.mxu0 0.0
    %402 = vmatprep.subr.mxu0 0.0
    %403 = vmatpush2.msra.mxu0 0.0
    %404 = vmatprep.subr.mxu0 0.0
    %405 = vmatpush2.msra.mxu0 0.0
    %406 = vmatprep.subr.mxu0 0.0
    %407 = vmatpush2.msra.mxu0 0.0
    %408 = vmatprep.subr.mxu0 0.0
    %409 = vmatpush2.msra.mxu0 0.0
    %410 = vmatprep.subr.mxu0 0.0
    %411 = vmatpush2.msra.mxu0 0.0
    %412 = vmatprep.subr.mxu0 0.0
    %413 = vmatpush2.msra.mxu0 0.0
    %414 = vmatprep.subr.mxu0 0.0
    %415 = vmatpush2.msra.mxu0 0.0
    %416 = vmatprep.subr.mxu0 0.0
    %417 = vmatpush2.msra.mxu0 0.0
    %418 = vmatprep.subr.mxu0 0.0
    %419 = vmatpush2.msra.mxu0 0.0
    %420 = vmatprep.subr.mxu0 0.0
    %421 = vmatpush2.msra.mxu0 0.0
    %422 = vmatprep.mubr.f32.mxu0 0.0
    %423 = vmatmul.mubr.f32.gmra.mxu0 %v347
    %v424 = vpop.f32.mrf.mxu0
    %v425 = vadd.f32 %v344, %v424
    %v426 = vpop.f32.mrf.mxu0
    %427 = vmatprep.mubr.f32.mxu0 0.0
    %428 = vmatmul.mubr.f32.gmra.mxu0 %v350
    %v429 = vpop.f32.mrf.mxu0
    %v430 = vadd.f32 %v344, %v429
    %v431 = vpop.f32.mrf.mxu0
    %432 = vmatprep.mubr.f32.mxu0 0.0
    %433 = vmatmul.mubr.f32.gmra.mxu0 %v353
    %v434 = vpop.f32.mrf.mxu0
    %v435 = vadd.f32 %v344, %v434
    %v436 = vpop.f32.mrf.mxu0
    %437 = vmatprep.mubr.f32.mxu0 0.0
    %438 = vmatmul.mubr.f32.gmra.mxu0 %v356
    %v439 = vpop.f32.mrf.mxu0
    %v440 = vadd.f32 %v344, %v439
    %v441 = vpop.f32.mrf.mxu0
    %442 = vdwg.mxu0
    %v443 = vmax.f32 %v425, 0.0
    %v444 = vmax.f32 %v430, 0.0
    %v445 = vmax.f32 %v435, 0.0
    %v446 = vmax.f32 %v440, 0.0
    %v447 = vld [vmem:[%s3 + $0x1] sm:$0x1]
    %v448 = vlaneseq
    %v449 = vshrl.u32 %v448, 7
    %v450 = vsub.s32 0, %v449
    %v451 = vrot.slane %v447, %v450
    %v452 = vmul.f32 %v443, %v451
    %v453 = vmul.f32 %v444, %v451
    %v454 = vmul.f32 %v445, %v451
    %v455 = vmul.f32 %v446, %v451
    %v456 = vld [vmem:[%s3 + $0x2] sm:$0x1]
    %v457 = vlaneseq
    %v458 = vshrl.u32 %v457, 7
    %v459 = vsub.s32 0, %v458
    %v460 = vrot.slane %v456, %v459
    %v461 = vadd.f32 %v452, %v460
    %v462 = vadd.f32 %v453, %v460
    %v463 = vadd.f32 %v454, %v460
    %v464 = vadd.f32 %v455, %v460
    %v465 = vmul.f32 %v85, %v461
    %v466 = vmul.f32 %v86, %v462
    %v467 = vmul.f32 %v87, %v463
    %v468 = vmul.f32 %v88, %v464
    %469 = vmatprep.subr.mxu0 0.0
    %470 = vmatpush1.msra.mxu0 0.0
    %471 = vmatprep.subr.mxu0 0.0
    %472 = vmatpush1.msra.mxu0 0.0
    %473 = vmatprep.subr.mxu0 0.0
    %474 = vmatpush1.msra.mxu0 0.0
    %475 = vmatprep.subr.mxu0 0.0
    %476 = vmatpush1.msra.mxu0 0.0
    %477 = vmatprep.subr.mxu0 0.0
    %478 = vmatpush1.msra.mxu0 0.0
    %479 = vmatprep.subr.mxu0 0.0
    %480 = vmatpush1.msra.mxu0 0.0
    %481 = vmatprep.subr.mxu0 0.0
    %482 = vmatpush1.msra.mxu0 0.0
    %483 = vmatprep.subr.mxu0 0.0
    %484 = vmatpush1.msra.mxu0 0.0
    %485 = vmatprep.subr.mxu0 0.0
    %486 = vmatpush1.msra.mxu0 0.0
    %487 = vmatprep.subr.mxu0 0.0
    %488 = vmatpush1.msra.mxu0 0.0
    %489 = vmatprep.subr.mxu0 0.0
    %490 = vmatpush1.msra.mxu0 0.0
    %491 = vmatprep.subr.mxu0 0.0
    %492 = vmatpush1.msra.mxu0 0.0
    %493 = vmatprep.subr.mxu0 0.0
    %494 = vmatpush1.msra.mxu0 0.0
    %495 = vmatprep.subr.mxu0 0.0
    %496 = vmatpush1.msra.mxu0 0.0
    %497 = vmatprep.subr.mxu0 0.0
    %498 = vmatpush1.msra.mxu0 %v462
    %499 = vmatprep.subr.mxu0 0.0
    %500 = vmatpush1.msra.mxu0 %v461
    %501 = vmatprep.subr.mxu0 0.0
    %502 = vmatpush2.msra.mxu0 0.0
    %503 = vmatprep.subr.mxu0 0.0
    %504 = vmatpush2.msra.mxu0 0.0
    %505 = vmatprep.subr.mxu0 0.0
    %506 = vmatpush2.msra.mxu0 0.0
    %507 = vmatprep.subr.mxu0 0.0
    %508 = vmatpush2.msra.mxu0 0.0
    %509 = vmatprep.subr.mxu0 0.0
    %510 = vmatpush2.msra.mxu0 0.0
    %511 = vmatprep.subr.mxu0 0.0
    %512 = vmatpush2.msra.mxu0 0.0
    %513 = vmatprep.subr.mxu0 0.0
    %514 = vmatpush2.msra.mxu0 0.0
    %515 = vmatprep.subr.mxu0 0.0
    %516 = vmatpush2.msra.mxu0 0.0
    %517 = vmatprep.subr.mxu0 0.0
    %518 = vmatpush2.msra.mxu0 0.0
    %519 = vmatprep.subr.mxu0 0.0
    %520 = vmatpush2.msra.mxu0 0.0
    %521 = vmatprep.subr.mxu0 0.0
    %522 = vmatpush2.msra.mxu0 0.0
    %523 = vmatprep.subr.mxu0 0.0
    %524 = vmatpush2.msra.mxu0 0.0
    %525 = vmatprep.subr.mxu0 0.0
    %526 = vmatpush2.msra.mxu0 0.0
    %527 = vmatprep.subr.mxu0 0.0
    %528 = vmatpush2.msra.mxu0 0.0
    %529 = vmatprep.subr.mxu0 0.0
    %530 = vmatpush2.msra.mxu0 0.0
    %531 = vmatprep.subr.mxu0 0.0
    %532 = vmatpush2.msra.mxu0 0.0
    %533 = vmatprep.mubr.f32.mxu0 0.0
    %534 = vmatmul.mubr.f32.gmra.mxu0 %v178
    %v535 = vpop.f32.mrf.mxu0
    %v536 = vadd.f32 %v465, %v535
    %v537 = vpop.f32.mrf.mxu0
    %538 = vmatprep.mubr.f32.mxu0 0.0
    %539 = vmatmul.mubr.f32.gmra.mxu0 %v181
    %v540 = vpop.f32.mrf.mxu0
    %v541 = vadd.f32 %v466, %v540
    %v542 = vpop.f32.mrf.mxu0
    %543 = vdwg.mxu0
    %544 = vmatprep.subr.mxu0 0.0
    %545 = vmatpush1.msra.mxu0 0.0
    %546 = vmatprep.subr.mxu0 0.0
    %547 = vmatpush1.msra.mxu0 0.0
    %548 = vmatprep.subr.mxu0 0.0
    %549 = vmatpush1.msra.mxu0 0.0
    %550 = vmatprep.subr.mxu0 0.0
    %551 = vmatpush1.msra.mxu0 0.0
    %552 = vmatprep.subr.mxu0 0.0
    %553 = vmatpush1.msra.mxu0 0.0
    %554 = vmatprep.subr.mxu0 0.0
    %555 = vmatpush1.msra.mxu0 0.0
    %556 = vmatprep.subr.mxu0 0.0
    %557 = vmatpush1.msra.mxu0 0.0
    %558 = vmatprep.subr.mxu0 0.0
    %559 = vmatpush1.msra.mxu0 0.0
    %560 = vmatprep.subr.mxu0 0.0
    %561 = vmatpush1.msra.mxu0 0.0
    %562 = vmatprep.subr.mxu0 0.0
    %563 = vmatpush1.msra.mxu0 0.0
    %564 = vmatprep.subr.mxu0 0.0
    %565 = vmatpush1.msra.mxu0 0.0
    %566 = vmatprep.subr.mxu0 0.0
    %567 = vmatpush1.msra.mxu0 0.0
    %568 = vmatprep.subr.mxu0 0.0
    %569 = vmatpush1.msra.mxu0 0.0
    %570 = vmatprep.subr.mxu0 0.0
    %571 = vmatpush1.msra.mxu0 0.0
    %572 = vmatprep.subr.mxu0 0.0
    %573 = vmatpush1.msra.mxu0 %v464
    %574 = vmatprep.subr.mxu0 0.0
    %575 = vmatpush1.msra.mxu0 %v463
    %576 = vmatprep.subr.mxu0 0.0
    %577 = vmatpush2.msra.mxu0 0.0
    %578 = vmatprep.subr.mxu0 0.0
    %579 = vmatpush2.msra.mxu0 0.0
    %580 = vmatprep.subr.mxu0 0.0
    %581 = vmatpush2.msra.mxu0 0.0
    %582 = vmatprep.subr.mxu0 0.0
    %583 = vmatpush2.msra.mxu0 0.0
    %584 = vmatprep.subr.mxu0 0.0
    %585 = vmatpush2.msra.mxu0 0.0
    %586 = vmatprep.subr.mxu0 0.0
    %587 = vmatpush2.msra.mxu0 0.0
    %588 = vmatprep.subr.mxu0 0.0
    %589 = vmatpush2.msra.mxu0 0.0
    %590 = vmatprep.subr.mxu0 0.0
    %591 = vmatpush2.msra.mxu0 0.0
    %592 = vmatprep.subr.mxu0 0.0
    %593 = vmatpush2.msra.mxu0 0.0
    %594 = vmatprep.subr.mxu0 0.0
    %595 = vmatpush2.msra.mxu0 0.0
    %596 = vmatprep.subr.mxu0 0.0
    %597 = vmatpush2.msra.mxu0 0.0
    %598 = vmatprep.subr.mxu0 0.0
    %599 = vmatpush2.msra.mxu0 0.0
    %600 = vmatprep.subr.mxu0 0.0
    %601 = vmatpush2.msra.mxu0 0.0
    %602 = vmatprep.subr.mxu0 0.0
    %603 = vmatpush2.msra.mxu0 0.0
    %604 = vmatprep.subr.mxu0 0.0
    %605 = vmatpush2.msra.mxu0 0.0
    %606 = vmatprep.subr.mxu0 0.0
    %607 = vmatpush2.msra.mxu0 0.0
    %608 = vmatprep.mubr.f32.mxu0 0.0
    %609 = vmatmul.mubr.f32.gmra.mxu0 %v259
    %v610 = vpop.f32.mrf.mxu0
    %v611 = vadd.f32 %v467, %v610
    %v612 = vpop.f32.mrf.mxu0
    %613 = vmatprep.mubr.f32.mxu0 0.0
    %614 = vmatmul.mubr.f32.gmra.mxu0 %v262
    %v615 = vpop.f32.mrf.mxu0
    %v616 = vadd.f32 %v468, %v615
    %v617 = vpop.f32.mrf.mxu0
    %618 = vdwg.mxu0
    %v619 = vld [vmem:[%s4] sm:$0xff]
    %v620 = vld [vmem:[%s4 + $0x8] sm:$0xff]
    %v621 = vld [vmem:[%s4 + $0x10] sm:$0xff]
    %v622 = vld [vmem:[%s4 + $0x18] sm:$0xff]
    %v623 = vld [vmem:[%s5] sm:$0x1]
    %v624 = vlaneseq
    %v625 = vshrl.u32 %v624, 7
    %v626 = vsub.s32 0, %v625
    %v627 = vrot.slane %v623, %v626
    %vm628 = vcmask 261120
    %v630 = vsel %vm628, %v536, 0
    %v633 = vsel %vm628, %v541, 0
    %v636 = vsel %vm628, %v611, 0
    %v639 = vsel %vm628, %v616, 0
    %641 = vmatprep.subr.mxu0 0.0
    %642 = vmatpush1.msra.mxu0 0.0
    %643 = vmatprep.subr.mxu0 0.0
    %644 = vmatpush1.msra.mxu0 0.0
    %645 = vmatprep.subr.mxu0 0.0
    %646 = vmatpush1.msra.mxu0 0.0
    %647 = vmatprep.subr.mxu0 0.0
    %648 = vmatpush1.msra.mxu0 0.0
    %649 = vmatprep.subr.mxu0 0.0
    %650 = vmatpush1.msra.mxu0 0.0
    %651 = vmatprep.subr.mxu0 0.0
    %652 = vmatpush1.msra.mxu0 0.0
    %653 = vmatprep.subr.mxu0 0.0
    %654 = vmatpush1.msra.mxu0 0.0
    %655 = vmatprep.subr.mxu0 0.0
    %656 = vmatpush1.msra.mxu0 0.0
    %657 = vmatprep.subr.mxu0 0.0
    %658 = vmatpush1.msra.mxu0 0.0
    %659 = vmatprep.subr.mxu0 0.0
    %660 = vmatpush1.msra.mxu0 0.0
    %661 = vmatprep.subr.mxu0 0.0
    %662 = vmatpush1.msra.mxu0 0.0
    %663 = vmatprep.subr.mxu0 0.0
    %664 = vmatpush1.msra.mxu0 0.0
    %665 = vmatprep.subr.mxu0 0.0
    %666 = vmatpush1.msra.mxu0 %v622
    %667 = vmatprep.subr.mxu0 0.0
    %668 = vmatpush1.msra.mxu0 %v621
    %669 = vmatprep.subr.mxu0 0.0
    %670 = vmatpush1.msra.mxu0 %v620
    %671 = vmatprep.subr.mxu0 0.0
    %672 = vmatpush1.msra.mxu0 %v619
    %673 = vmatprep.subr.mxu0 0.0
    %674 = vmatpush2.msra.mxu0 0.0
    %675 = vmatprep.subr.mxu0 0.0
    %676 = vmatpush2.msra.mxu0 0.0
    %677 = vmatprep.subr.mxu0 0.0
    %678 = vmatpush2.msra.mxu0 0.0
    %679 = vmatprep.subr.mxu0 0.0
    %680 = vmatpush2.msra.mxu0 0.0
    %681 = vmatprep.subr.mxu0 0.0
    %682 = vmatpush2.msra.mxu0 0.0
    %683 = vmatprep.subr.mxu0 0.0
    %684 = vmatpush2.msra.mxu0 0.0
    %685 = vmatprep.subr.mxu0 0.0
    %686 = vmatpush2.msra.mxu0 0.0
    %687 = vmatprep.subr.mxu0 0.0
    %688 = vmatpush2.msra.mxu0 0.0
    %689 = vmatprep.subr.mxu0 0.0
    %690 = vmatpush2.msra.mxu0 0.0
    %691 = vmatprep.subr.mxu0 0.0
    %692 = vmatpush2.msra.mxu0 0.0
    %693 = vmatprep.subr.mxu0 0.0
    %694 = vmatpush2.msra.mxu0 0.0
    %695 = vmatprep.subr.mxu0 0.0
    %696 = vmatpush2.msra.mxu0 0.0
    %697 = vmatprep.subr.mxu0 0.0
    %698 = vmatpush2.msra.mxu0 0.0
    %699 = vmatprep.subr.mxu0 0.0
    %700 = vmatpush2.msra.mxu0 0.0
    %701 = vmatprep.subr.mxu0 0.0
    %702 = vmatpush2.msra.mxu0 0.0
    %703 = vmatprep.subr.mxu0 0.0
    %704 = vmatpush2.msra.mxu0 0.0
    %705 = vmatprep.mubr.f32.mxu0 0.0
    %706 = vmatmul.mubr.f32.gmra.mxu0 %v630
    %v707 = vpop.f32.mrf.mxu0
    %v708 = vadd.f32 %v627, %v707
    %v709 = vpop.f32.mrf.mxu0
    %710 = vmatprep.mubr.f32.mxu0 0.0
    %711 = vmatmul.mubr.f32.gmra.mxu0 %v633
    %v712 = vpop.f32.mrf.mxu0
    %v713 = vadd.f32 %v627, %v712
    %v714 = vpop.f32.mrf.mxu0
    %715 = vmatprep.mubr.f32.mxu0 0.0
    %716 = vmatmul.mubr.f32.gmra.mxu0 %v636
    %v717 = vpop.f32.mrf.mxu0
    %v718 = vadd.f32 %v627, %v717
    %v719 = vpop.f32.mrf.mxu0
    %720 = vmatprep.mubr.f32.mxu0 0.0
    %721 = vmatmul.mubr.f32.gmra.mxu0 %v639
    %v722 = vpop.f32.mrf.mxu0
    %v723 = vadd.f32 %v627, %v722
    %v724 = vpop.f32.mrf.mxu0
    %725 = vdwg.mxu0
    %v726 = vmax.f32 %v708, 0.0
    %v727 = vmax.f32 %v713, 0.0
    %v728 = vmax.f32 %v718, 0.0
    %v729 = vmax.f32 %v723, 0.0
    %v730 = vld [vmem:[%s5 + $0x1] sm:$0x1]
    %v731 = vlaneseq
    %v732 = vshrl.u32 %v731, 7
    %v733 = vsub.s32 0, %v732
    %v734 = vrot.slane %v730, %v733
    %v735 = vmul.f32 %v726, %v734
    %v736 = vmul.f32 %v727, %v734
    %v737 = vmul.f32 %v728, %v734
    %v738 = vmul.f32 %v729, %v734
    %v739 = vld [vmem:[%s5 + $0x2] sm:$0x1]
    %v740 = vlaneseq
    %v741 = vshrl.u32 %v740, 7
    %v742 = vsub.s32 0, %v741
    %v743 = vrot.slane %v739, %v742
    %v744 = vadd.f32 %v735, %v743
    %v745 = vadd.f32 %v736, %v743
    %v746 = vadd.f32 %v737, %v743
    %v747 = vadd.f32 %v738, %v743
    %v748 = vsel %vm628, %v744, 0.0
    %v749 = vsel %vm628, %v745, 0.0
    %v750 = vadd.f32 %v748, %v749
    %v751 = vrot.slane %v750, 4
    %v752 = vadd.f32 %v750, %v751
    %v753 = vrot.slane %v752, 2
    %v754 = vadd.f32 %v752, %v753
    %v755 = vrot.slane %v754, 1
    %v756 = vadd.f32 %v754, %v755
    %v757 = vsel %vm628, %v746, 0.0
    %v758 = vsel %vm628, %v747, 0.0
    %v759 = vadd.f32 %v757, %v758
    %v760 = vrot.slane %v759, 4
    %v761 = vadd.f32 %v759, %v760
    %v762 = vrot.slane %v761, 2
    %v763 = vadd.f32 %v761, %v762
    %v764 = vrot.slane %v763, 1
    %v765 = vadd.f32 %v763, %v764
    %v766 = vld [vmem:[#allocation5] sm:$0xff]
    %v767 = vld [vmem:[#allocation5 + $0x8] sm:$0xff]
    %v768 = vld [vmem:[#allocation5 + $0x10] sm:$0xff]
    %v769 = vld [vmem:[#allocation5 + $0x18] sm:$0xff]
    %v770 = vld [vmem:[%s7] sm:$0x1]
    %v772 = vlaneseq
    %v773 = vshrl.u32 %v772, 7
    %v774 = vsub.s32 0, %v773
    %v775 = vrot.slane %v770, %v774
    %vm779 = vcmask 1041409
    %v780 = vsel %vm779, %v765, %v756
    %v781 = vsel %vm628, %v780, 0
    %783 = vmatprep.subr.mxu0 0.0
    %784 = vmatpush1.msra.mxu0 0.0
    %785 = vmatprep.subr.mxu0 0.0
    %786 = vmatpush1.msra.mxu0 0.0
    %787 = vmatprep.subr.mxu0 0.0
    %788 = vmatpush1.msra.mxu0 0.0
    %789 = vmatprep.subr.mxu0 0.0
    %790 = vmatpush1.msra.mxu0 0.0
    %791 = vmatprep.subr.mxu0 0.0
    %792 = vmatpush1.msra.mxu0 0.0
    %793 = vmatprep.subr.mxu0 0.0
    %794 = vmatpush1.msra.mxu0 0.0
    %795 = vmatprep.subr.mxu0 0.0
    %796 = vmatpush1.msra.mxu0 0.0
    %797 = vmatprep.subr.mxu0 0.0
    %798 = vmatpush1.msra.mxu0 0.0
    %799 = vmatprep.subr.mxu0 0.0
    %800 = vmatpush1.msra.mxu0 0.0
    %801 = vmatprep.subr.mxu0 0.0
    %802 = vmatpush1.msra.mxu0 0.0
    %803 = vmatprep.subr.mxu0 0.0
    %804 = vmatpush1.msra.mxu0 0.0
    %805 = vmatprep.subr.mxu0 0.0
    %806 = vmatpush1.msra.mxu0 0.0
    %807 = vmatprep.subr.mxu0 0.0
    %808 = vmatpush1.msra.mxu0 %v769
    %809 = vmatprep.subr.mxu0 0.0
    %810 = vmatpush1.msra.mxu0 %v768
    %811 = vmatprep.subr.mxu0 0.0
    %812 = vmatpush1.msra.mxu0 %v767
    %813 = vmatprep.subr.mxu0 0.0
    %814 = vmatpush1.msra.mxu0 %v766
    %815 = vmatprep.subr.mxu0 0.0
    %816 = vmatpush2.msra.mxu0 0.0
    %817 = vmatprep.subr.mxu0 0.0
    %818 = vmatpush2.msra.mxu0 0.0
    %819 = vmatprep.subr.mxu0 0.0
    %820 = vmatpush2.msra.mxu0 0.0
    %821 = vmatprep.subr.mxu0 0.0
    %822 = vmatpush2.msra.mxu0 0.0
    %823 = vmatprep.subr.mxu0 0.0
    %824 = vmatpush2.msra.mxu0 0.0
    %825 = vmatprep.subr.mxu0 0.0
    %826 = vmatpush2.msra.mxu0 0.0
    %827 = vmatprep.subr.mxu0 0.0
    %828 = vmatpush2.msra.mxu0 0.0
    %829 = vmatprep.subr.mxu0 0.0
    %830 = vmatpush2.msra.mxu0 0.0
    %831 = vmatprep.subr.mxu0 0.0
    %832 = vmatpush2.msra.mxu0 0.0
    %833 = vmatprep.subr.mxu0 0.0
    %834 = vmatpush2.msra.mxu0 0.0
    %835 = vmatprep.subr.mxu0 0.0
    %836 = vmatpush2.msra.mxu0 0.0
    %837 = vmatprep.subr.mxu0 0.0
    %838 = vmatpush2.msra.mxu0 0.0
    %839 = vmatprep.subr.mxu0 0.0
    %840 = vmatpush2.msra.mxu0 0.0
    %841 = vmatprep.subr.mxu0 0.0
    %842 = vmatpush2.msra.mxu0 0.0
    %843 = vmatprep.subr.mxu0 0.0
    %844 = vmatpush2.msra.mxu0 0.0
    %845 = vmatprep.subr.mxu0 0.0
    %846 = vmatpush2.msra.mxu0 0.0
    %847 = vmatprep.mubr.f32.mxu0 0.0
    %848 = vmatmul.mubr.f32.gmra.mxu0 %v781
    %v849 = vpop.f32.mrf.mxu0
    %v850 = vadd.f32 %v775, %v849
    %v851 = vpop.f32.mrf.mxu0
    %852 = vdwg.mxu0
    %853 = vst [vmem:[#allocation7] sm:$0x3] %v850
    // Predicated region
    $region42: #{tpu_custom_call.1} parent=1 // pred_check
      _
    $region43: #{tpu_custom_call.1} parent=1 // pred_check_branch
      %855 = sbr.rel (0) target = $region45
    $region44: #{tpu_custom_call.1} parent=1 // pred_region
      %s857 = ssub.s32 32, 32
      %858 = vsyncadd [#allocation4], %s857
      %s860 = sshll.u32 [#allocation7], 4
      %s861 = int_to_ptr.vmem [resolvable:$true] %s860
      %863 = dma.vmem_to_hbm [thread:$0]  %s861, 32, %s8, [#allocation4]
    $region45: #{tpu_custom_call.1} parent=1 // pred_fallthru
      _
    // Predicated region
    $region46: #{tpu_custom_call.1} parent=1 // pred_check
      _
    $region47: #{tpu_custom_call.1} parent=1 // pred_check_branch
      %865 = sbr.rel (0) target = $region49
    $region48: #{tpu_custom_call.1} parent=1 // pred_region
      %866 = dma.done [#allocation4], 32
    $region49: #{tpu_custom_call.1} parent=1 // pred_fallthru
      _
    %867 = vsyncpa [#allocation3], 1
    %868 = vsyncpa [#allocation6], 1
    %869 = vsyncpa [#allocation4], 1

</llo_original>
